<compile_context>
chip_gen: v6e
topology: v6e:2x2x1
jax: 0.10.0
libtpu: 0.0.40
codegen_flags: <defaults>
</compile_context>

<pallas_src>
import jax
import jax.numpy as jnp
from jax import lax
from jax.experimental import pallas as pl
from jax.experimental.pallas import tpu as pltpu

EPS = 1e-5  # PyTorch AdaLayerNorm default eps


# ---------------------------------- kernel -----------------------------------
def _ada_layer_norm_kernel(x_ref, g_ref, b_ref, o_ref):
    # x_ref: (TB, TT, C)  tile of the input, channels in lanes
    # g_ref: (TB, 1,  C)  (1 + gamma is applied here; g_ref holds gamma)
    # b_ref: (TB, 1,  C)  beta
    x = x_ref[...]

    # LayerNorm over the channel (lane) axis, biased variance (PyTorch).
    mean = jnp.mean(x, axis=-1, keepdims=True)          # XLU reduction
    xc = x - mean
    var = jnp.mean(xc * xc, axis=-1, keepdims=True)
    x_hat = xc * lax.rsqrt(var + EPS)                   # EUP rsqrt (free slot)

    o_ref[...] = (1.0 + g_ref[...]) * x_hat + b_ref[...]


# ------------------------------- tile chooser ---------------------------------
_MAX_TILE_BYTES = 2 * 1024 * 1024  # per-buffer budget; ~4x with dbl-buffered in+out


def _choose_tiles(B, T, C):
    row_bytes = C * 4  # f32 rows
    if T * row_bytes <= _MAX_TILE_BYTES:
        tile_t = T  # full sequence in one tile (always a legal full-dim block)
    else:
        # multiple of 8 (sublane), capped at 512 rows (measured ~roofline)
        tile_t = max(8, min(512, (_MAX_TILE_BYTES // row_bytes) // 8 * 8))
    if tile_t == T and B * tile_t * row_bytes <= _MAX_TILE_BYTES:
        tile_b = B  # whole tensor in a single grid step (tiny-shape path)
    else:
        tile_b = 1
    return tile_b, tile_t


# ---------------------------------- wrapper -----------------------------------
def ada_layer_norm(x, s, fc_weight, fc_bias):
    """AdaLayerNorm forward.

    x:         (B, T, C)  channels last (matches the StyleTTS call site)
    s:         (B, S)     style vector
    fc_weight: (2C, S)    PyTorch nn.Linear weight layout
    fc_bias:   (2C,)      PyTorch nn.Linear bias
    returns:   (B, T, C)  float32
    """
    B, T, C = x.shape
    x = x.astype(jnp.float32)

    # fc(s) hoisted out of the kernel: tiny (B,S)x(S,2C) matmul, f32-exact.
    h = jnp.einsum("bs,os->bo", s.astype(jnp.float32),
                   fc_weight.astype(jnp.float32),
                   precision=lax.Precision.HIGHEST) + fc_bias.astype(jnp.float32)
    gamma = h[:, :C].reshape(B, 1, C)
    beta = h[:, C:].reshape(B, 1, C)

    tile_b, tile_t = _choose_tiles(B, T, C)
    grid = (pl.cdiv(B, tile_b), pl.cdiv(T, tile_t))

    return pl.pallas_call(
        _ada_layer_norm_kernel,
        grid=grid,
        out_shape=jax.ShapeDtypeStruct((B, T, C), jnp.float32),
        in_specs=[
            pl.BlockSpec((tile_b, tile_t, C), lambda b, t: (b, t, 0)),  # x tile
            pl.BlockSpec((tile_b, 1, C), lambda b, t: (b, 0, 0)),       # gamma
            pl.BlockSpec((tile_b, 1, C), lambda b, t: (b, 0, 0)),       # beta
        ],
        out_specs=pl.BlockSpec((tile_b, tile_t, C), lambda b, t: (b, t, 0)),
        compiler_params=pltpu.CompilerParams(
            dimension_semantics=("parallel", "parallel")),
    )(x, gamma, beta)


# ------------------------- pure-JAX reference (PyTorch) ------------------------
def ada_layer_norm_reference(x, s, fc_weight, fc_bias):
    h = jnp.einsum("bs,os->bo", s, fc_weight,
                   precision=lax.Precision.HIGHEST) + fc_bias            # (B, 2C)
    C = x.shape[-1]
    gamma = h[:, None, :C]
    beta = h[:, None, C:]
    mean = jnp.mean(x, axis=-1, keepdims=True)
    var = jnp.mean((x - mean) ** 2, axis=-1, keepdims=True)
    x_hat = (x - mean) / jnp.sqrt(var + EPS)
    return (1.0 + gamma) * x_hat + beta


# ------------------------------------ main ------------------------------------
if __name__ == "__main__":
    # Small shapes consistent with the module: seq T=16, channels C=128 (fills
    # the 128-lane dimension), style S=64, batch B=2.
    B, T, C, S = 2, 16, 128, 64

    key = jax.random.PRNGKey(0)
    kx, ks, kw, kb = jax.random.split(key, 4)
    x = jax.random.normal(kx, (B, T, C), jnp.float32)
    s = jax.random.normal(ks, (B, S), jnp.float32)
    fc_weight = 0.1 * jax.random.normal(kw, (2 * C, S), jnp.float32)  # torch (out, in)
    fc_bias = 0.1 * jax.random.normal(kb, (2 * C,), jnp.float32)

    out = jax.jit(ada_layer_norm)(x, s, fc_weight, fc_bias)
    out = jax.block_until_ready(out)

    ref = jax.block_until_ready(ada_layer_norm_reference(x, s, fc_weight, fc_bias))

    assert out.shape == (B, T, C), out.shape
    err = float(jnp.max(jnp.abs(out - ref)))
    assert err < 1e-3, f"max abs error {err}"
    print("KERNEL_OK")
</pallas_src>

<mosaic_0001>
module attributes {stable_mosaic.version = 11 : i64} {
  func.func @_ada_layer_norm_kernel(%arg0: i32, %arg1: i32, %arg2: memref<2x16x128xf32, #tpu.memory_space<vmem>>, %arg3: memref<2x1x128xf32, #tpu.memory_space<vmem>>, %arg4: memref<2x1x128xf32, #tpu.memory_space<vmem>>, %arg5: memref<2x16x128xf32, #tpu.memory_space<vmem>>) attributes {dimension_semantics = [#tpu.dimension_semantics<parallel>, #tpu.dimension_semantics<parallel>], iteration_bounds = array<i64: 1, 1>, scalar_prefetch = 0 : i64, scratch_operands = 0 : i64, tpu.core_type = #tpu.core_type<tc>, window_params = [{transform_indices = @transform_0, window_bounds = array<i64: 2, 16, 128>}, {transform_indices = @transform_1, window_bounds = array<i64: 2, 1, 128>}, {transform_indices = @transform_2, window_bounds = array<i64: 2, 1, 128>}, {transform_indices = @transform_3, window_bounds = array<i64: 2, 16, 128>}]} {
    %c0 = arith.constant 0 : index
    %c0_0 = arith.constant 0 : index
    %c0_1 = arith.constant 0 : index
    %0 = vector.load %arg2[%c0, %c0_0, %c0_1] : memref<2x16x128xf32, #tpu.memory_space<vmem>>, vector<2x16x128xf32>
    %cst = arith.constant dense<0.000000e+00> : vector<2x16xf32>
    %1 = vector.multi_reduction <add>, %0, %cst [2] : vector<2x16x128xf32> to vector<2x16xf32>
    %2 = vector.shape_cast %1 : vector<2x16xf32> to vector<2x16x1xf32>
    %cst_2 = arith.constant 1.280000e+02 : f32
    %3 = vector.broadcast %cst_2 : f32 to vector<2x16x1xf32>
    %4 = arith.divf %2, %3 : vector<2x16x1xf32>
    %5 = vector.broadcast %4 : vector<2x16x1xf32> to vector<2x16x128xf32>
    %6 = arith.subf %0, %5 : vector<2x16x128xf32>
    %7 = arith.mulf %6, %6 : vector<2x16x128xf32>
    %cst_3 = arith.constant dense<0.000000e+00> : vector<2x16xf32>
    %8 = vector.multi_reduction <add>, %7, %cst_3 [2] : vector<2x16x128xf32> to vector<2x16xf32>
    %9 = vector.shape_cast %8 : vector<2x16xf32> to vector<2x16x1xf32>
    %cst_4 = arith.constant 1.280000e+02 : f32
    %10 = vector.broadcast %cst_4 : f32 to vector<2x16x1xf32>
    %11 = arith.divf %9, %10 : vector<2x16x1xf32>
    %cst_5 = arith.constant 9.99999974E-6 : f32
    %12 = vector.broadcast %cst_5 : f32 to vector<2x16x1xf32>
    %13 = arith.addf %11, %12 : vector<2x16x1xf32>
    %14 = math.rsqrt %13 : vector<2x16x1xf32>
    %15 = vector.broadcast %14 : vector<2x16x1xf32> to vector<2x16x128xf32>
    %16 = arith.mulf %6, %15 : vector<2x16x128xf32>
    %c0_6 = arith.constant 0 : index
    %c0_7 = arith.constant 0 : index
    %c0_8 = arith.constant 0 : index
    %17 = vector.load %arg3[%c0_6, %c0_7, %c0_8] : memref<2x1x128xf32, #tpu.memory_space<vmem>>, vector<2x1x128xf32>
    %cst_9 = arith.constant 1.000000e+00 : f32
    %18 = vector.broadcast %cst_9 : f32 to vector<2x1x128xf32>
    %19 = arith.addf %18, %17 : vector<2x1x128xf32>
    %20 = vector.broadcast %19 : vector<2x1x128xf32> to vector<2x16x128xf32>
    %21 = arith.mulf %20, %16 : vector<2x16x128xf32>
    %c0_10 = arith.constant 0 : index
    %c0_11 = arith.constant 0 : index
    %c0_12 = arith.constant 0 : index
    %22 = vector.load %arg4[%c0_10, %c0_11, %c0_12] : memref<2x1x128xf32, #tpu.memory_space<vmem>>, vector<2x1x128xf32>
    %23 = vector.broadcast %22 : vector<2x1x128xf32> to vector<2x16x128xf32>
    %24 = arith.addf %21, %23 : vector<2x16x128xf32>
    %c0_13 = arith.constant 0 : index
    %c0_14 = arith.constant 0 : index
    %c0_15 = arith.constant 0 : index
    %25 = vector.load %arg5[%c0_13, %c0_14, %c0_15] : memref<2x16x128xf32, #tpu.memory_space<vmem>>, vector<2x16x128xf32>
    tpu.vector_store %arg5[%c0_13, %c0_14, %c0_15], %24 {strides = array<i32>} : memref<2x16x128xf32, #tpu.memory_space<vmem>>, vector<2x16x128xf32>,
    return
  }
  func.func @transform_0(%arg0: i32, %arg1: i32) -> (i32, i32, i32) {
    %c0_i32 = arith.constant 0 : i32
    %c0_i32_0 = arith.constant 0 : i32
    return %arg0, %arg1, %c0_i32 : i32, i32, i32
  }
  func.func @transform_1(%arg0: i32, %arg1: i32) -> (i32, i32, i32) {
    %c0_i32 = arith.constant 0 : i32
    %c0_i32_0 = arith.constant 0 : i32
    %c0_i32_1 = arith.constant 0 : i32
    return %arg0, %c0_i32, %c0_i32_0 : i32, i32, i32
  }
  func.func @transform_2(%arg0: i32, %arg1: i32) -> (i32, i32, i32) {
    %c0_i32 = arith.constant 0 : i32
    %c0_i32_0 = arith.constant 0 : i32
    %c0_i32_1 = arith.constant 0 : i32
    return %arg0, %c0_i32, %c0_i32_0 : i32, i32, i32
  }
  func.func @transform_3(%arg0: i32, %arg1: i32) -> (i32, i32, i32) {
    %c0_i32 = arith.constant 0 : i32
    %c0_i32_0 = arith.constant 0 : i32
    return %arg0, %arg1, %c0_i32 : i32, i32, i32
  }
}

</mosaic_0001>

<llo_original>
// kernel: ada_layer_norm.1
$region0: #{ada_layer_norm.1}
  #allocation0 [shape = 'u32[]', space=smem, size = 0x4, offset = 0x4, fixed_abs, tag = 'smem constant byte address 0x4 - core index']
  #allocation1 [shape = 'u32[144,128]{1,0:T(1,128)}', space=vmem, size = 0x12000, scoped, tag = 'internal scratch']
  %s0 = inlined_call_operand.vmem [shape: f32[2,16,128], index: 0, kind: input, shape index: {}]
  %s1 = inlined_call_operand.vmem [shape: f32[2,1,128], index: 1, kind: input, shape index: {}]
  %s2 = inlined_call_operand.vmem [shape: f32[2,1,128], index: 2, kind: input, shape index: {}]
  %s3 = inlined_call_operand.hbm [shape: f32[2,16,128], index: 3, kind: output, shape index: {}]
  %s4 = sld [smem:[#allocation0]]
  $region22: #{ada_layer_norm.1} parent=0
    _
  %s6 = ssub.s32 1, %s4
  %s7 = scalar_select 0, %s6, %s4
  $region1: #{ada_layer_norm.1} parent=0
    #allocation2 [shape = 'u8[16384]{0}', space=vmem, size = 0x4000, scoped, tag = 'output window, operand 0, single buffered']
    #allocation3 [shape = 's32[1]{0}', space=sflag, size = 0x4, scoped, tag = 'scoped memory for ada_layer_norm.1']
    %8 = vsyncpa [#allocation3], 0
    // Predicated region
    $region2: #{ada_layer_norm.1} parent=1 // pred_check
      _
    $region3: #{ada_layer_norm.1} parent=1 // pred_check_branch
      %10 = sbr.rel (0) target = $region5
    $region4: #{ada_layer_norm.1} parent=1 // pred_region
      _
    $region5: #{ada_layer_norm.1} parent=1 // pred_fallthru
      _
    // Predicated region
    $region6: #{ada_layer_norm.1} parent=1 // pred_check
      _
    $region7: #{ada_layer_norm.1} parent=1 // pred_check_branch
      %12 = sbr.rel (0) target = $region9
    $region8: #{ada_layer_norm.1} parent=1 // pred_region
      _
    $region9: #{ada_layer_norm.1} parent=1 // pred_fallthru
      _
    // Predicated region
    $region10: #{ada_layer_norm.1} parent=1 // pred_check
      _
    $region11: #{ada_layer_norm.1} parent=1 // pred_check_branch
      %14 = sbr.rel (0) target = $region13
    $region12: #{ada_layer_norm.1} parent=1 // pred_region
      _
    $region13: #{ada_layer_norm.1} parent=1 // pred_fallthru
      _
    %v15 = vld [vmem:[%s0] sm:$0xff]
    %v16 = vld [vmem:[%s0 + $0x8] sm:$0xff]
    %v17 = vld [vmem:[%s0 + $0x10] sm:$0xff]
    %v18 = vld [vmem:[%s0 + $0x18] sm:$0xff]
    %19 = vadd.xlane.f32.xlu0 %v15
    %v20 = vpop.xlane.xlu0 %19
    %21 = vadd.xlane.f32.xlu0 %v16
    %v22 = vpop.xlane.xlu0 %21
    %23 = vadd.xlane.f32.xlu0 %v17
    %v24 = vpop.xlane.xlu0 %23
    %25 = vadd.xlane.f32.xlu0 %v18
    %v26 = vpop.xlane.xlu0 %25
    %v27 = vrcp.pop 128.0
    %v28 = vmul.f32 %v20, %v27
    %v29 = vmul.f32 %v22, %v27
    %v30 = vmul.f32 %v24, %v27
    %v31 = vmul.f32 %v26, %v27
    %v32 = vsub.f32 %v15, %v28
    %v33 = vsub.f32 %v16, %v29
    %v34 = vsub.f32 %v17, %v30
    %v35 = vsub.f32 %v18, %v31
    %v36 = vmul.f32 %v32, %v32
    %v37 = vmul.f32 %v33, %v33
    %v38 = vmul.f32 %v34, %v34
    %v39 = vmul.f32 %v35, %v35
    %40 = vadd.xlane.f32.xlu0 %v36
    %v41 = vpop.xlane.xlu0 %40
    %42 = vadd.xlane.f32.xlu0 %v37
    %v43 = vpop.xlane.xlu0 %42
    %44 = vadd.xlane.f32.xlu0 %v38
    %v45 = vpop.xlane.xlu0 %44
    %46 = vadd.xlane.f32.xlu0 %v39
    %v47 = vpop.xlane.xlu0 %46
    %v48 = vmul.f32 %v41, %v27
    %v49 = vmul.f32 %v43, %v27
    %v50 = vmul.f32 %v45, %v27
    %v51 = vmul.f32 %v47, %v27
    %v52 = vadd.f32 %v48, 1e-05
    %v53 = vadd.f32 %v49, 1e-05
    %v54 = vadd.f32 %v50, 1e-05
    %v55 = vadd.f32 %v51, 1e-05
    %v56 = vrsqrt.pop %v52
    %v57 = vrsqrt.pop %v53
    %v58 = vrsqrt.pop %v54
    %v59 = vrsqrt.pop %v55
    %v60 = vmul.f32 %v32, %v56
    %v61 = vmul.f32 %v33, %v57
    %v62 = vmul.f32 %v34, %v58
    %v63 = vmul.f32 %v35, %v59
    %v64 = vld [vmem:[%s1] sm:$0x1]
    %v65 = vld [vmem:[%s1 + $0x1] sm:$0x1]
    %v66 = vadd.f32 %v64, 1.0
    %v67 = vadd.f32 %v65, 1.0
    %v70 = vlaneseq
    %v71 = vshrl.u32 %v70, 7
    %v72 = vsub.s32 0, %v71
    %v73 = vrot.slane %v66, %v72
    %v74 = vlaneseq
    %v75 = vshrl.u32 %v74, 7
    %v76 = vsub.s32 0, %v75
    %v77 = vrot.slane %v67, %v76
    %v80 = vmul.f32 %v73, %v60
    %v81 = vmul.f32 %v73, %v61
    %v82 = vmul.f32 %v77, %v62
    %v83 = vmul.f32 %v77, %v63
    %v84 = vld [vmem:[%s2] sm:$0x1]
    %v85 = vld [vmem:[%s2 + $0x1] sm:$0x1]
    %v88 = vlaneseq
    %v89 = vshrl.u32 %v88, 7
    %v90 = vsub.s32 0, %v89
    %v91 = vrot.slane %v84, %v90
    %v92 = vlaneseq
    %v93 = vshrl.u32 %v92, 7
    %v94 = vsub.s32 0, %v93
    %v95 = vrot.slane %v85, %v94
    %v98 = vadd.f32 %v80, %v91
    %v99 = vadd.f32 %v81, %v91
    %v100 = vadd.f32 %v82, %v95
    %v101 = vadd.f32 %v83, %v95
    %102 = vst [vmem:[#allocation2] sm:$0xff] %v98
    %103 = vst [vmem:[#allocation2 + $0x8] sm:$0xff] %v99
    %104 = vst [vmem:[#allocation2 + $0x10] sm:$0xff] %v100
    %105 = vst [vmem:[#allocation2 + $0x18] sm:$0xff] %v101
    // Predicated region
    $region14: #{ada_layer_norm.1} parent=1 // pred_check
      _
    $region15: #{ada_layer_norm.1} parent=1 // pred_check_branch
      %107 = sbr.rel (0) target = $region17
    $region16: #{ada_layer_norm.1} parent=1 // pred_region
      %s109 = ssub.s32 512, 512
      %110 = vsyncadd [#allocation3], %s109
      %s111 = sshll.u32 [#allocation2], 4
      %s112 = int_to_ptr.vmem [resolvable:$true] %s111
      %117 = dma.vmem_to_hbm [thread:$0]  %s112, 512, %s3, [#allocation3], 128, 128, 8
    $region17: #{ada_layer_norm.1} parent=1 // pred_fallthru
      _
    // Predicated region
    $region18: #{ada_layer_norm.1} parent=1 // pred_check
      _
    $region19: #{ada_layer_norm.1} parent=1 // pred_check_branch
      %119 = sbr.rel (0) target = $region21
    $region20: #{ada_layer_norm.1} parent=1 // pred_region
      %120 = dma.done [#allocation3], 512
    $region21: #{ada_layer_norm.1} parent=1 // pred_fallthru
      _
    %121 = vsyncpa [#allocation3], 1

</llo_original>
